<compile_context>
chip_gen: v5e
topology: v5e:2x2
jax: 0.10.0
libtpu: 0.0.40
codegen_flags: <defaults>
</compile_context>

<pallas_src>
import math

import jax
import jax.numpy as jnp
from jax.experimental import pallas as pl
from jax.experimental.pallas import tpu as pltpu


def _round_up(x, m):
    return ((x + m - 1) // m) * m


def lr_kernel(x_ref, w_ref, b_ref, o_ref, acc_ref):
    """One (batch-tile, k-tile) step of y = x @ W^T + b.

    x_ref  : (tm, tk)        activation tile
    w_ref  : (Cpad, tk)      weight tile, PyTorch (out, in) layout (no transpose)
    b_ref  : (1, Cpad) f32   bias, padded to a full lane width
    o_ref  : (tm, Cpad)      lane-dense output tile
    acc_ref: (tm, Cpad) f32  accumulator scratch, resident across the k axis
    """
    k = pl.program_id(1)

    @pl.when(k == 0)
    def _():
        acc_ref[...] = jnp.zeros_like(acc_ref)

    # Contract x's feature axis (dim 1) with w's feature axis (dim 1):
    # (tm, tk) . (Cpad, tk) -> (tm, Cpad), f32 accumulation on the MXU.
    acc_ref[...] += jax.lax.dot_general(
        x_ref[...], w_ref[...],
        dimension_numbers=(((1,), (1,)), ((), ())),
        preferred_element_type=jnp.float32,
    )

    @pl.when(k == pl.num_programs(1) - 1)
    def _():
        o_ref[...] = (acc_ref[...] + b_ref[...]).astype(o_ref.dtype)


def prepare_lr_params(weight, bias, compute_dtype=jnp.float32, lane=128):
    """One-time parameter preparation (call at init, NOT per forward).

    weight : (class_num, feature_size)  -- nn.Linear (out, in) layout
    bias   : (class_num,)
    Returns (w_pad (Cpad, F), b_pad (1, Cpad)) with the class dim zero-padded
    to a multiple of `lane`; weight layout is kept as (out, in) so no
    transpose is ever materialized in HBM.
    """
    class_num, _ = weight.shape
    c_pad = _round_up(class_num, lane)
    w = weight.astype(compute_dtype)
    b = bias.astype(jnp.float32)
    if c_pad != class_num:
        w = jnp.pad(w, ((0, c_pad - class_num), (0, 0)))
        b = jnp.pad(b, (0, c_pad - class_num))
    return w, b.reshape(1, c_pad)


def lr_forward(x, w_pad, b_pad, class_num, *, tm=256, tk=512):
    """LR forward: flatten x row-major (like torch x.view(B, -1)) and run the
    tiled Pallas linear kernel. Returns (B, class_num) float32."""
    B = x.shape[0]
    F = math.prod(x.shape[1:])
    Cpad, Fw = w_pad.shape
    assert Fw >= F and class_num <= Cpad

    compute_dtype = w_pad.dtype
    # Strict module semantics are .to(float32); keep bf16 inputs native to
    # avoid a full HBM up-cast (accumulation is still f32 in the kernel).
    if x.dtype != jnp.bfloat16:
        x = x.astype(jnp.float32)
    x_flat = x.reshape(B, F).astype(compute_dtype)

    # Tile sizes: batch tile a multiple of 8, feature tile a multiple of 128.
    tm = min(tm, _round_up(B, 8))
    tk = min(tk, _round_up(F, 128))
    B_pad = _round_up(B, tm)
    F_pad = _round_up(F, tk)
    if B_pad != B or F_pad != F:
        x_flat = jnp.pad(x_flat, ((0, B_pad - B), (0, F_pad - F)))
    if F_pad != Fw:
        w_pad = jnp.pad(w_pad, ((0, 0), (0, F_pad - Fw)))

    grid = (B_pad // tm, F_pad // tk)

    itemsize = jnp.dtype(compute_dtype).itemsize
    cost = pl.CostEstimate(
        flops=2 * B_pad * F_pad * Cpad,
        transcendentals=0,
        bytes_accessed=itemsize * (B_pad * F_pad + Cpad * F_pad) + 4 * B_pad * Cpad,
    )

    out = pl.pallas_call(
        lr_kernel,
        out_shape=jax.ShapeDtypeStruct((B_pad, Cpad), jnp.float32),
        grid_spec=pltpu.PrefetchScalarGridSpec(
            num_scalar_prefetch=0,
            grid=grid,
            in_specs=[
                pl.BlockSpec((tm, tk), lambda i, k: (i, k)),     # x tile
                pl.BlockSpec((Cpad, tk), lambda i, k: (0, k)),   # weight tile (out, in)
                pl.BlockSpec((1, Cpad), lambda i, k: (0, 0)),    # bias
            ],
            out_specs=pl.BlockSpec((tm, Cpad), lambda i, k: (i, 0)),
            scratch_shapes=[pltpu.VMEM((tm, Cpad), jnp.float32)],
        ),
        compiler_params=pltpu.CompilerParams(
            dimension_semantics=("parallel", "arbitrary"),
        ),
        cost_estimate=cost,
    )(x_flat, w_pad, b_pad)

    # Strip batch/class padding.
    return out[:B, :class_num]


if __name__ == "__main__":
    # Small shapes consistent with the module (CIFAR-like x_shape=(4,16,16)).
    B, Cin, H, W = 2, 4, 16, 16
    class_num = 10
    feature_size = Cin * H * W  # np.prod(x_shape) = 1024

    key = jax.random.PRNGKey(0)
    kx, kw, kb = jax.random.split(key, 3)

    x = jax.random.normal(kx, (B, Cin, H, W), dtype=jnp.float32)
    # nn.Linear shapes: weight (out, in), bias (out,)
    weight = jax.random.normal(kw, (class_num, feature_size), dtype=jnp.float32) * 0.02
    bias = jax.random.normal(kb, (class_num,), dtype=jnp.float32) * 0.02

    # One-time parameter prep (padding + cast), then forward.
    w_pad, b_pad = prepare_lr_params(weight, bias)
    out = lr_forward(x, w_pad, b_pad, class_num)
    out = jax.block_until_ready(out)

    # Sanity check against plain-JAX reference.
    ref = x.reshape(B, -1).astype(jnp.float32) @ weight.T + bias
    assert out.shape == (B, class_num)
    assert jnp.allclose(out, ref, atol=1e-4, rtol=1e-4)

    print("KERNEL_OK")
</pallas_src>

<mosaic_0001>
module attributes {stable_mosaic.version = 11 : i64} {
  func.func @lr_kernel(%arg0: i32, %arg1: i32, %arg2: memref<8x512xf32, #tpu.memory_space<vmem>>, %arg3: memref<128x512xf32, #tpu.memory_space<vmem>>, %arg4: memref<1x128xf32, #tpu.memory_space<vmem>>, %arg5: memref<8x128xf32, #tpu.memory_space<vmem>>, %arg6: memref<8x128xf32, #tpu.memory_space<vmem>>) attributes {dimension_semantics = [#tpu.dimension_semantics<parallel>, #tpu.dimension_semantics<arbitrary>], iteration_bounds = array<i64: 1, 2>, scalar_prefetch = 0 : i64, scratch_operands = 1 : i64, tpu.core_type = #tpu.core_type<tc>, window_params = [{transform_indices = @transform_0, window_bounds = array<i64: 8, 512>}, {transform_indices = @transform_1, window_bounds = array<i64: 128, 512>}, {pipeline_mode = #tpu.pipeline_mode<synchronous>, transform_indices = @transform_2, window_bounds = array<i64: 1, 128>}, {transform_indices = @transform_3, window_bounds = array<i64: 8, 128>}]} {
    %c0_i32 = arith.constant 0 : i32
    %0 = arith.cmpi eq, %arg1, %c0_i32 : i32
    %1 = arith.extui %0 : i1 to i32
    %c0_i32_0 = arith.constant 0 : i32
    %2 = arith.cmpi ne, %1, %c0_i32_0 : i32
    scf.if %2 {
      %cst_9 = arith.constant 0.000000e+00 : f32
      %12 = vector.broadcast %cst_9 : f32 to vector<8x128xf32>
      %c0_10 = arith.constant 0 : index
      %c0_11 = arith.constant 0 : index
      %13 = vector.load %arg6[%c0_10, %c0_11] : memref<8x128xf32, #tpu.memory_space<vmem>>, vector<8x128xf32>
      tpu.vector_store %arg6[%c0_10, %c0_11], %12 {strides = array<i32>} : memref<8x128xf32, #tpu.memory_space<vmem>>, vector<8x128xf32>,
    } else {
    }
    %c0 = arith.constant 0 : index
    %c0_1 = arith.constant 0 : index
    %3 = vector.load %arg6[%c0, %c0_1] : memref<8x128xf32, #tpu.memory_space<vmem>>, vector<8x128xf32>
    %c0_2 = arith.constant 0 : index
    %c0_3 = arith.constant 0 : index
    %4 = vector.load %arg2[%c0_2, %c0_3] : memref<8x512xf32, #tpu.memory_space<vmem>>, vector<8x512xf32>
    %c0_4 = arith.constant 0 : index
    %c0_5 = arith.constant 0 : index
    %5 = vector.load %arg3[%c0_4, %c0_5] : memref<128x512xf32, #tpu.memory_space<vmem>>, vector<128x512xf32>
    %cst = arith.constant dense<0.000000e+00> : vector<8x128xf32>
    %6 = tpu.matmul %4, %5, %cst {dimension_numbers = #tpu.dot_dimension_numbers<[1], [1], [0], [0], [0, 0, 1, 0], [], []>} : vector<8x512xf32>, vector<128x512xf32>, vector<8x128xf32> -> vector<8x128xf32>
    %7 = arith.addf %3, %6 : vector<8x128xf32>
    %c0_6 = arith.constant 0 : index
    %c0_7 = arith.constant 0 : index
    %8 = vector.load %arg6[%c0_6, %c0_7] : memref<8x128xf32, #tpu.memory_space<vmem>>, vector<8x128xf32>
    tpu.vector_store %arg6[%c0_6, %c0_7], %7 {strides = array<i32>} : memref<8x128xf32, #tpu.memory_space<vmem>>, vector<8x128xf32>,
    %c1_i32 = arith.constant 1 : i32
    %9 = arith.cmpi eq, %arg1, %c1_i32 : i32
    %10 = arith.extui %9 : i1 to i32
    %c0_i32_8 = arith.constant 0 : i32
    %11 = arith.cmpi ne, %10, %c0_i32_8 : i32
    scf.if %11 {
      %c0_9 = arith.constant 0 : index
      %c0_10 = arith.constant 0 : index
      %12 = vector.load %arg6[%c0_9, %c0_10] : memref<8x128xf32, #tpu.memory_space<vmem>>, vector<8x128xf32>
      %c0_11 = arith.constant 0 : index
      %c0_12 = arith.constant 0 : index
      %13 = vector.load %arg4[%c0_11, %c0_12] : memref<1x128xf32, #tpu.memory_space<vmem>>, vector<1x128xf32>
      %14 = vector.broadcast %13 : vector<1x128xf32> to vector<8x128xf32>
      %15 = arith.addf %12, %14 : vector<8x128xf32>
      %c0_13 = arith.constant 0 : index
      %c0_14 = arith.constant 0 : index
      %16 = vector.load %arg5[%c0_13, %c0_14] : memref<8x128xf32, #tpu.memory_space<vmem>>, vector<8x128xf32>
      tpu.vector_store %arg5[%c0_13, %c0_14], %15 {strides = array<i32>} : memref<8x128xf32, #tpu.memory_space<vmem>>, vector<8x128xf32>,
    } else {
    }
    return
  }
  func.func @transform_0(%arg0: i32, %arg1: i32) -> (i32, i32) {
    %c0_i32 = arith.constant 0 : i32
    return %arg0, %arg1 : i32, i32
  }
  func.func @transform_1(%arg0: i32, %arg1: i32) -> (i32, i32) {
    %c0_i32 = arith.constant 0 : i32
    %c0_i32_0 = arith.constant 0 : i32
    return %c0_i32, %arg1 : i32, i32
  }
  func.func @transform_2(%arg0: i32, %arg1: i32) -> (i32, i32) {
    %c0_i32 = arith.constant 0 : i32
    %c0_i32_0 = arith.constant 0 : i32
    %c0_i32_1 = arith.constant 0 : i32
    return %c0_i32, %c0_i32_0 : i32, i32
  }
  func.func @transform_3(%arg0: i32, %arg1: i32) -> (i32, i32) {
    %c0_i32 = arith.constant 0 : i32
    %c0_i32_0 = arith.constant 0 : i32
    return %arg0, %c0_i32 : i32, i32
  }
}

</mosaic_0001>

<llo_original>
// kernel: tpu_custom_call.1
$region0: #{tpu_custom_call.1}
  #allocation0 [shape = 'u32[]', space=smem, size = 0x4, offset = 0x4, fixed_abs, tag = 'smem constant byte address 0x4 - core index']
  #allocation1 [shape = 'u32[72,128]{1,0:T(1,128)}', space=vmem, size = 0x9000, scoped, tag = 'internal scratch']
  #allocation2 [shape = 'f32[8,128]{1,0:T(8,128)}', space=vmem, size = 0x1000, scoped, tag = 'scratch operand']
  %s0 = inlined_call_operand.hbm [shape: f32[8,1024], index: 0, kind: input, shape index: {}]
  %s1 = inlined_call_operand.hbm [shape: f32[128,1024], index: 1, kind: input, shape index: {}]
  %s2 = inlined_call_operand.vmem [shape: f32[1,128], index: 2, kind: input, shape index: {}]
  %s3 = inlined_call_operand.hbm [shape: f32[8,128], index: 3, kind: output, shape index: {}]
  %s4 = sld [smem:[#allocation0]]
  $region61: #{tpu_custom_call.1} parent=0
    _
  %s6 = ssub.s32 1, %s4
  %s7 = scalar_select 0, %s6, %s4
  $region1: #{tpu_custom_call.1} parent=0
    #allocation3 [shape = 'u8[32768]{0}', space=vmem, size = 0x8000, scoped, tag = 'input window, operand 0']
    #allocation4 [shape = 's32[2]{0}', space=sflag, size = 0x8, scoped, tag = 'scoped memory for tpu_custom_call.1']
    #allocation5 [shape = 's32[2]{0}', space=sflag, size = 0x8, scoped, tag = 'scoped memory for tpu_custom_call.1']
    #allocation6 [shape = 'u8[524288]{0}', space=vmem, size = 0x80000, scoped, tag = 'input window, operand 1']
    #allocation7 [shape = 's32[2]{0}', space=sflag, size = 0x8, scoped, tag = 'scoped memory for tpu_custom_call.1']
    #allocation8 [shape = 'u8[4096]{0}', space=vmem, size = 0x1000, scoped, tag = 'output window, operand 0, single buffered']
    %8 = vsyncpa [#allocation4], 0
    %s9 = scalar_lea.sflag [#allocation4], 1
    %10 = vsyncpa %s9, 0
    %11 = vsyncpa [#allocation7], 0
    %s12 = scalar_lea.sflag [#allocation7], 1
    %13 = vsyncpa %s12, 0
    %14 = vsyncpa [#allocation5], 0
    loop: start=0, step=1, limit=4
    $region2: #{tpu_custom_call.1} parent=1 // loop_pre_header
      _
    $region3: #{tpu_custom_call.1} parent=1 // loop_header
      %s16 = sphi 0, %s20
      %p17 = scmp.ge.s32.totalorder %s16, 4
      %s23 = sphi 0, %s35
      %s24 = sphi 0, %s31
      %s25 = sphi 0, %s23
      %s26 = sphi 0, %s24
      %s27 = sphi 0, %s25
      %s28 = sphi 0, %s26
      %s40 = sphi 0, %s42
      %s43 = sphi 0, %s40
      %s44 = sphi 0, %s43
      %s60 = sphi 0, %s44
      %s66 = sphi 0, %s68
      %s69 = sphi 0, %s66
      %s70 = sphi 0, %s69
      %s86 = sphi 0, %s70
      %s90 = sphi 0, %s90
      %s92 = sphi 0, %s90
      %s93 = sphi 0, %s92
      %s107 = sphi 0, %s93
      %s113 = sphi 0, %s115
      %s116 = sphi 0, %s113
      %s117 = sphi 0, %s116
      %s133 = sphi 0, %s117
    $region4: #{tpu_custom_call.1} parent=1 // loop_header_branch
      %19 = sbr.rel (%p17) target = $region8
    $region5: #{tpu_custom_call.1} parent=1 // loop_body
      %s21 = ssub.s32 %s16, 1
      %s22 = ssub.s32 %s16, 2
      %s29 = sadd.s32 1, %s24
      %p30 = scmp.ge.s32.totalorder %s29, 2
      %s31 = scalar_select %p30, 0, %s29
      %s32 = sadd.s32 1, %s23
      %s33 = scalar_select %p30, %s32, %s23
      %p34 = scmp.ge.s32.totalorder %s33, 1
      %s35 = scalar_select %p34, 0, %s33
      %s36 = ssub.s32 %s23, %s35
      %s37 = ssub.s32 %s24, %s31
      %s38 = sor.u32 %s36, %s37
      %p39 = scmp.eq.s32.totalorder %s38, 0
      %s41 = sadd.s32 %s40, 1
      %s42 = scalar_select %p39, %s40, %s41
      %p45 = pneg %p39
      %p46 = scmp.eq.s32.totalorder %s16, 1
      %p47 = por %p45, %p46
      %p48 = scmp.ne.s32.totalorder %s40, %s43
      %p49 = scmp.eq.s32.totalorder %s16, 0
      %p50 = por %p48, %p49
      %p51 = scmp.ne.s32.totalorder %s40, %s43
      %p52 = scmp.eq.s32.totalorder %s21, 1
      %p53 = por %p51, %p52
      %p54 = scmp.ne.s32.totalorder %s43, %s44
      %p55 = scmp.eq.s32.totalorder %s21, 0
      %p56 = por %p54, %p55
      %p57 = scmp.ne.s32.totalorder %s43, %s44
      %p58 = scmp.eq.s32.totalorder %s22, 1
      %p59 = por %p57, %p58
      %p61 = scmp.ne.s32.totalorder %s44, %s60
      %p62 = scmp.eq.s32.totalorder %s22, 0
      %p63 = por %p61, %p62
      %s64 = ssub.s32 %s24, %s31
      %p65 = scmp.eq.s32.totalorder %s64, 0
      %s67 = sadd.s32 %s66, 1
      %s68 = scalar_select %p65, %s66, %s67
      %p71 = pneg %p65
      %p72 = scmp.eq.s32.totalorder %s16, 1
      %p73 = por %p71, %p72
      %p74 = scmp.ne.s32.totalorder %s66, %s69
      %p75 = scmp.eq.s32.totalorder %s16, 0
      %p76 = por %p74, %p75
      %p77 = scmp.ne.s32.totalorder %s66, %s69
      %p78 = scmp.eq.s32.totalorder %s21, 1
      %p79 = por %p77, %p78
      %p80 = scmp.ne.s32.totalorder %s69, %s70
      %p81 = scmp.eq.s32.totalorder %s21, 0
      %p82 = por %p80, %p81
      %p83 = scmp.ne.s32.totalorder %s69, %s70
      %p84 = scmp.eq.s32.totalorder %s22, 1
      %p85 = por %p83, %p84
      %p87 = scmp.ne.s32.totalorder %s70, %s86
      %p88 = scmp.eq.s32.totalorder %s22, 0
      %p89 = por %p87, %p88
      %s91 = sadd.s32 %s90, 1
      %p94 = scmp.eq.s32.totalorder %s16, 1
      %p95 = scmp.ne.s32.totalorder %s90, %s92
      %p96 = scmp.eq.s32.totalorder %s16, 0
      %p97 = por %p95, %p96
      %p98 = scmp.ne.s32.totalorder %s90, %s92
      %p99 = scmp.eq.s32.totalorder %s21, 1
      %p100 = por %p98, %p99
      %p101 = scmp.ne.s32.totalorder %s92, %s93
      %p102 = scmp.eq.s32.totalorder %s21, 0
      %p103 = por %p101, %p102
      %p104 = scmp.ne.s32.totalorder %s92, %s93
      %p105 = scmp.eq.s32.totalorder %s22, 1
      %p106 = por %p104, %p105
      %p108 = scmp.ne.s32.totalorder %s93, %s107
      %p109 = scmp.eq.s32.totalorder %s22, 0
      %p110 = por %p108, %p109
      %s111 = ssub.s32 %s23, %s35
      %p112 = scmp.eq.s32.totalorder %s111, 0
      %s114 = sadd.s32 %s113, 1
      %s115 = scalar_select %p112, %s113, %s114
      %p118 = pneg %p112
      %p119 = scmp.eq.s32.totalorder %s16, 1
      %p120 = por %p118, %p119
      %p121 = scmp.ne.s32.totalorder %s113, %s116
      %p122 = scmp.eq.s32.totalorder %s16, 0
      %p123 = por %p121, %p122
      %p124 = scmp.ne.s32.totalorder %s113, %s116
      %p125 = scmp.eq.s32.totalorder %s21, 1
      %p126 = por %p124, %p125
      %p127 = scmp.ne.s32.totalorder %s116, %s117
      %p128 = scmp.eq.s32.totalorder %s21, 0
      %p129 = por %p127, %p128
      %p130 = scmp.ne.s32.totalorder %s116, %s117
      %p131 = scmp.eq.s32.totalorder %s22, 1
      %p132 = por %p130, %p131
      %p134 = scmp.ne.s32.totalorder %s117, %s133
      %p135 = scmp.eq.s32.totalorder %s22, 0
      %p136 = por %p134, %p135
      %p137 = scmp.le.s32.totalorder 1, %s16
      %p138 = scmp.lt.s32.totalorder %s16, 3
      %p139 = pnand %p137, %p138
      %p140 = pneg %p139
      // Predicated region
      $region9: #{tpu_custom_call.1} parent=5 // pred_check
        _
      $region10: #{tpu_custom_call.1} parent=5 // pred_check_branch
        %142 = sbr.rel (%p139) target = $region12
      $region11: #{tpu_custom_call.1} parent=5 // pred_region
        %s143 = ssub.s32 %s16, 1
        // Predicated region
        $region13: #{tpu_custom_call.1} parent=11 // pred_check
          %p144 = pneg %p103
        $region14: #{tpu_custom_call.1} parent=11 // pred_check_branch
          %146 = sbr.rel (%p144) target = $region16
        $region15: #{tpu_custom_call.1} parent=11 // pred_region
          _
        $region16: #{tpu_custom_call.1} parent=11 // pred_fallthru
          _
      $region12: #{tpu_custom_call.1} parent=5 // pred_fallthru
        _
      %p147 = scmp.lt.s32.totalorder %s16, 2
      // Predicated region
      $region17: #{tpu_custom_call.1} parent=5 // pred_check
        %p148 = pneg %p147
      $region18: #{tpu_custom_call.1} parent=5 // pred_check_branch
        %150 = sbr.rel (%p148) target = $region20
      $region19: #{tpu_custom_call.1} parent=5 // pred_region
        // Predicated region
        $region21: #{tpu_custom_call.1} parent=19 // pred_check
          %p151 = pneg %p50
        $region22: #{tpu_custom_call.1} parent=19 // pred_check_branch
          %153 = sbr.rel (%p151) target = $region24
        $region23: #{tpu_custom_call.1} parent=19 // pred_region
          %s154 = sand.u32 %s40, 1
          %s155 = scalar_lea.sflag [#allocation4], %s154
          %s156 = sand.u32 %s40, 1
          %s157 = smul.addr %s156, 32
          %s158 = scalar_lea.vmem [#allocation3], %s157
          %s159 = smul.u32 4, %s24
          %161 = vsyncadd %s155, 0
          %s162 = smul.addr %s23, 8
          %s163 = sadd.s32 %s159, %s162
          %s164 = smul.addr %s163, 8
          %s165 = scalar_lea.hbm %s0, %s164
          %s167 = sshll.u32 %s165, 4
          %s168 = int_to_ptr.hbm [resolvable:$true] %s167
          %s169 = sshll.u32 %s158, 4
          %s170 = int_to_ptr.vmem [resolvable:$true] %s169
          %172 = dma.hbm_to_vmem [thread:$0]  %s168, 512, %s170, %s155
        $region24: #{tpu_custom_call.1} parent=19 // pred_fallthru
          _
        // Predicated region
        $region25: #{tpu_custom_call.1} parent=19 // pred_check
          %p173 = pneg %p76
        $region26: #{tpu_custom_call.1} parent=19 // pred_check_branch
          %175 = sbr.rel (%p173) target = $region28
        $region27: #{tpu_custom_call.1} parent=19 // pred_region
          %s176 = sand.u32 %s66, 1
          %s177 = scalar_lea.sflag [#allocation7], %s176
          %s178 = sand.u32 %s66, 1
          %s179 = smul.addr %s178, 512
          %s180 = scalar_lea.vmem [#allocation6], %s179
          %s181 = smul.u32 4, %s24
          %183 = vsyncadd %s177, 0
          %s184 = smul.addr %s181, 8
          %s185 = scalar_lea.hbm %s1, %s184
          %s186 = sshll.u32 %s185, 4
          %s187 = int_to_ptr.hbm [resolvable:$true] %s186
          %s188 = sshll.u32 %s180, 4
          %s189 = int_to_ptr.vmem [resolvable:$true] %s188
          %194 = dma.hbm_to_vmem [thread:$0]  %s187, 8192, %s189, %s177, 1024, 512, 32
        $region28: #{tpu_custom_call.1} parent=19 // pred_fallthru
          _
      $region20: #{tpu_custom_call.1} parent=5 // pred_fallthru
        _
      %p195 = scmp.le.s32.totalorder 1, %s16
      %p196 = scmp.lt.s32.totalorder %s16, 3
      %p197 = pnand %p195, %p196
      %p198 = pneg %p197
      // Predicated region
      $region29: #{tpu_custom_call.1} parent=5 // pred_check
        _
      $region30: #{tpu_custom_call.1} parent=5 // pred_check_branch
        %200 = sbr.rel (%p197) target = $region32
      $region31: #{tpu_custom_call.1} parent=5 // pred_region
        %s201 = ssub.s32 %s16, 1
        %s202 = sand.u32 %s43, 1
        %s203 = scalar_lea.sflag [#allocation4], %s202
        %s204 = sand.u32 %s43, 1
        %s205 = smul.addr %s204, 32
        %s206 = scalar_lea.vmem [#allocation3], %s205
        // Predicated region
        $region33: #{tpu_custom_call.1} parent=31 // pred_check
          %p207 = pneg %p56
        $region34: #{tpu_custom_call.1} parent=31 // pred_check_branch
          %209 = sbr.rel (%p207) target = $region36
        $region35: #{tpu_custom_call.1} parent=31 // pred_region
          %211 = dma.done %s203, 512
        $region36: #{tpu_custom_call.1} parent=31 // pred_fallthru
          _
        %s212 = sand.u32 %s69, 1
        %s213 = scalar_lea.sflag [#allocation7], %s212
        %s214 = sand.u32 %s69, 1
        %s215 = smul.addr %s214, 512
        %s216 = scalar_lea.vmem [#allocation6], %s215
        // Predicated region
        $region37: #{tpu_custom_call.1} parent=31 // pred_check
          %p217 = pneg %p82
        $region38: #{tpu_custom_call.1} parent=31 // pred_check_branch
          %219 = sbr.rel (%p217) target = $region40
        $region39: #{tpu_custom_call.1} parent=31 // pred_region
          %221 = dma.done %s213, 8192
        $region40: #{tpu_custom_call.1} parent=31 // pred_fallthru
          _
        %s222 = sand.u32 %s43, 1
        %s223 = scalar_lea.sflag [#allocation4], %s222
        %s224 = sand.u32 %s43, 1
        %s225 = smul.addr %s224, 32
        %s226 = scalar_lea.vmem [#allocation3], %s225
        %p227 = pneg %p56
        %p228 = pneg %p53
        %s229 = sand.u32 %s69, 1
        %s230 = scalar_lea.sflag [#allocation7], %s229
        %s231 = sand.u32 %s69, 1
        %s232 = smul.addr %s231, 512
        %s233 = scalar_lea.vmem [#allocation6], %s232
        %p234 = pneg %p82
        %p235 = pneg %p79
        %p236 = pneg %p103
        %p237 = pneg %p100
        %p238 = pneg %p129
        %p239 = pneg %p126
        %s240 = smul.u32 4, %s26
        %s241 = smul.u32 4, %s26
        %p242 = scmp.eq.s32.totalorder %s26, 0
        // Predicated region
        $region41: #{tpu_custom_call.1} parent=31 // pred_check
          %p243 = pneg %p242
        $region42: #{tpu_custom_call.1} parent=31 // pred_check_branch
          %245 = sbr.rel (%p243) target = $region44
        $region43: #{tpu_custom_call.1} parent=31 // pred_region
          %246 = vst [vmem:[#allocation2] sm:$0xff] 0.0
        $region44: #{tpu_custom_call.1} parent=31 // pred_fallthru
          _
        %v247 = vld [vmem:[#allocation2] sm:$0xff]
        %v248 = vld [vmem:[%s206] sm:$0xff]
        %v249 = vld [vmem:[%s206 + $0x8] sm:$0xff]
        %v250 = vld [vmem:[%s206 + $0x10] sm:$0xff]
        %v251 = vld [vmem:[%s206 + $0x18] sm:$0xff]
        %v252 = vld [vmem:[%s216] sm:$0xff]
        %v253 = vld [vmem:[%s216 + $0x8] sm:$0xff]
        %v254 = vld [vmem:[%s216 + $0x10] sm:$0xff]
        %v255 = vld [vmem:[%s216 + $0x18] sm:$0xff]
        %v256 = vld [vmem:[%s216 + $0x20] sm:$0xff]
        %v257 = vld [vmem:[%s216 + $0x28] sm:$0xff]
        %v258 = vld [vmem:[%s216 + $0x30] sm:$0xff]
        %v259 = vld [vmem:[%s216 + $0x38] sm:$0xff]
        %v260 = vld [vmem:[%s216 + $0x40] sm:$0xff]
        %v261 = vld [vmem:[%s216 + $0x48] sm:$0xff]
        %v262 = vld [vmem:[%s216 + $0x50] sm:$0xff]
        %v263 = vld [vmem:[%s216 + $0x58] sm:$0xff]
        %v264 = vld [vmem:[%s216 + $0x60] sm:$0xff]
        %v265 = vld [vmem:[%s216 + $0x68] sm:$0xff]
        %v266 = vld [vmem:[%s216 + $0x70] sm:$0xff]
        %v267 = vld [vmem:[%s216 + $0x78] sm:$0xff]
        %v268 = vld [vmem:[%s216 + $0x80] sm:$0xff]
        %v269 = vld [vmem:[%s216 + $0x88] sm:$0xff]
        %v270 = vld [vmem:[%s216 + $0x90] sm:$0xff]
        %v271 = vld [vmem:[%s216 + $0x98] sm:$0xff]
        %v272 = vld [vmem:[%s216 + $0xa0] sm:$0xff]
        %v273 = vld [vmem:[%s216 + $0xa8] sm:$0xff]
        %v274 = vld [vmem:[%s216 + $0xb0] sm:$0xff]
        %v275 = vld [vmem:[%s216 + $0xb8] sm:$0xff]
        %v276 = vld [vmem:[%s216 + $0xc0] sm:$0xff]
        %v277 = vld [vmem:[%s216 + $0xc8] sm:$0xff]
        %v278 = vld [vmem:[%s216 + $0xd0] sm:$0xff]
        %v279 = vld [vmem:[%s216 + $0xd8] sm:$0xff]
        %v280 = vld [vmem:[%s216 + $0xe0] sm:$0xff]
        %v281 = vld [vmem:[%s216 + $0xe8] sm:$0xff]
        %v282 = vld [vmem:[%s216 + $0xf0] sm:$0xff]
        %v283 = vld [vmem:[%s216 + $0xf8] sm:$0xff]
        %v284 = vld [vmem:[%s216 + $0x100] sm:$0xff]
        %v285 = vld [vmem:[%s216 + $0x108] sm:$0xff]
        %v286 = vld [vmem:[%s216 + $0x110] sm:$0xff]
        %v287 = vld [vmem:[%s216 + $0x118] sm:$0xff]
        %v288 = vld [vmem:[%s216 + $0x120] sm:$0xff]
        %v289 = vld [vmem:[%s216 + $0x128] sm:$0xff]
        %v290 = vld [vmem:[%s216 + $0x130] sm:$0xff]
        %v291 = vld [vmem:[%s216 + $0x138] sm:$0xff]
        %v292 = vld [vmem:[%s216 + $0x140] sm:$0xff]
        %v293 = vld [vmem:[%s216 + $0x148] sm:$0xff]
        %v294 = vld [vmem:[%s216 + $0x150] sm:$0xff]
        %v295 = vld [vmem:[%s216 + $0x158] sm:$0xff]
        %v296 = vld [vmem:[%s216 + $0x160] sm:$0xff]
        %v297 = vld [vmem:[%s216 + $0x168] sm:$0xff]
        %v298 = vld [vmem:[%s216 + $0x170] sm:$0xff]
        %v299 = vld [vmem:[%s216 + $0x178] sm:$0xff]
        %v300 = vld [vmem:[%s216 + $0x180] sm:$0xff]
        %v301 = vld [vmem:[%s216 + $0x188] sm:$0xff]
        %v302 = vld [vmem:[%s216 + $0x190] sm:$0xff]
        %v303 = vld [vmem:[%s216 + $0x198] sm:$0xff]
        %v304 = vld [vmem:[%s216 + $0x1a0] sm:$0xff]
        %v305 = vld [vmem:[%s216 + $0x1a8] sm:$0xff]
        %v306 = vld [vmem:[%s216 + $0x1b0] sm:$0xff]
        %v307 = vld [vmem:[%s216 + $0x1b8] sm:$0xff]
        %v308 = vld [vmem:[%s216 + $0x1c0] sm:$0xff]
        %v309 = vld [vmem:[%s216 + $0x1c8] sm:$0xff]
        %v310 = vld [vmem:[%s216 + $0x1d0] sm:$0xff]
        %v311 = vld [vmem:[%s216 + $0x1d8] sm:$0xff]
        %v312 = vld [vmem:[%s216 + $0x1e0] sm:$0xff]
        %v313 = vld [vmem:[%s216 + $0x1e8] sm:$0xff]
        %v314 = vld [vmem:[%s216 + $0x1f0] sm:$0xff]
        %v315 = vld [vmem:[%s216 + $0x1f8] sm:$0xff]
        %316 = vmatpush.xpose.msra.mxu0 %v312
        %317 = vmatpush.xpose.msra.mxu0 %v308
        %318 = vmatpush.xpose.msra.mxu0 %v304
        %319 = vmatpush.xpose.msra.mxu0 %v300
        %320 = vmatpush.xpose.msra.mxu0 %v296
        %321 = vmatpush.xpose.msra.mxu0 %v292
        %322 = vmatpush.xpose.msra.mxu0 %v288
        %323 = vmatpush.xpose.msra.mxu0 %v284
        %324 = vmatpush.xpose.msra.mxu0 %v280
        %325 = vmatpush.xpose.msra.mxu0 %v276
        %326 = vmatpush.xpose.msra.mxu0 %v272
        %327 = vmatpush.xpose.msra.mxu0 %v268
        %328 = vmatpush.xpose.msra.mxu0 %v264
        %329 = vmatpush.xpose.msra.mxu0 %v260
        %330 = vmatpush.xpose.msra.mxu0 %v256
        %331 = vmatpush.xpose.msra.mxu0 %v252
        %332 = vmatmul.f32.gmra.mxu0 %v248
        %v333 = vpop.f32.mrf.mxu0
        %v334 = vadd.f32 0.0, %v333
        %335 = vdwg.mxu0
        %336 = vmatpush.xpose.msra.mxu0 %v313
        %337 = vmatpush.xpose.msra.mxu0 %v309
        %338 = vmatpush.xpose.msra.mxu0 %v305
        %339 = vmatpush.xpose.msra.mxu0 %v301
        %340 = vmatpush.xpose.msra.mxu0 %v297
        %341 = vmatpush.xpose.msra.mxu0 %v293
        %342 = vmatpush.xpose.msra.mxu0 %v289
        %343 = vmatpush.xpose.msra.mxu0 %v285
        %344 = vmatpush.xpose.msra.mxu0 %v281
        %345 = vmatpush.xpose.msra.mxu0 %v277
        %346 = vmatpush.xpose.msra.mxu0 %v273
        %347 = vmatpush.xpose.msra.mxu0 %v269
        %348 = vmatpush.xpose.msra.mxu0 %v265
        %349 = vmatpush.xpose.msra.mxu0 %v261
        %350 = vmatpush.xpose.msra.mxu0 %v257
        %351 = vmatpush.xpose.msra.mxu0 %v253
        %352 = vmatmul.f32.gmra.mxu0 %v249
        %v353 = vpop.f32.mrf.mxu0
        %v354 = vadd.f32 %v334, %v353
        %355 = vdwg.mxu0
        %356 = vmatpush.xpose.msra.mxu0 %v314
        %357 = vmatpush.xpose.msra.mxu0 %v310
        %358 = vmatpush.xpose.msra.mxu0 %v306
        %359 = vmatpush.xpose.msra.mxu0 %v302
        %360 = vmatpush.xpose.msra.mxu0 %v298
        %361 = vmatpush.xpose.msra.mxu0 %v294
        %362 = vmatpush.xpose.msra.mxu0 %v290
        %363 = vmatpush.xpose.msra.mxu0 %v286
        %364 = vmatpush.xpose.msra.mxu0 %v282
        %365 = vmatpush.xpose.msra.mxu0 %v278
        %366 = vmatpush.xpose.msra.mxu0 %v274
        %367 = vmatpush.xpose.msra.mxu0 %v270
        %368 = vmatpush.xpose.msra.mxu0 %v266
        %369 = vmatpush.xpose.msra.mxu0 %v262
        %370 = vmatpush.xpose.msra.mxu0 %v258
        %371 = vmatpush.xpose.msra.mxu0 %v254
        %372 = vmatmul.f32.gmra.mxu0 %v250
        %v373 = vpop.f32.mrf.mxu0
        %v374 = vadd.f32 %v354, %v373
        %375 = vdwg.mxu0
        %376 = vmatpush.xpose.msra.mxu0 %v315
        %377 = vmatpush.xpose.msra.mxu0 %v311
        %378 = vmatpush.xpose.msra.mxu0 %v307
        %379 = vmatpush.xpose.msra.mxu0 %v303
        %380 = vmatpush.xpose.msra.mxu0 %v299
        %381 = vmatpush.xpose.msra.mxu0 %v295
        %382 = vmatpush.xpose.msra.mxu0 %v291
        %383 = vmatpush.xpose.msra.mxu0 %v287
        %384 = vmatpush.xpose.msra.mxu0 %v283
        %385 = vmatpush.xpose.msra.mxu0 %v279
        %386 = vmatpush.xpose.msra.mxu0 %v275
        %387 = vmatpush.xpose.msra.mxu0 %v271
        %388 = vmatpush.xpose.msra.mxu0 %v267
        %389 = vmatpush.xpose.msra.mxu0 %v263
        %390 = vmatpush.xpose.msra.mxu0 %v259
        %391 = vmatpush.xpose.msra.mxu0 %v255
        %392 = vmatmul.f32.gmra.mxu0 %v251
        %v393 = vpop.f32.mrf.mxu0
        %v394 = vadd.f32 %v374, %v393
        %395 = vdwg.mxu0
        %v396 = vadd.f32 %v247, %v394
        %397 = vst [vmem:[#allocation2] sm:$0xff] %v396
        %p398 = scmp.eq.s32.totalorder %s26, 1
        // Predicated region
        $region45: #{tpu_custom_call.1} parent=31 // pred_check
          %p399 = pneg %p398
        $region46: #{tpu_custom_call.1} parent=31 // pred_check_branch
          %401 = sbr.rel (%p399) target = $region48
        $region47: #{tpu_custom_call.1} parent=31 // pred_region
          %v402 = vld [vmem:[#allocation2] sm:$0xff]
          %v403 = vld [vmem:[%s2] sm:$0x1]
          %v405 = vperm.slane %v403, 0
          %v407 = vadd.f32 %v402, %v405
          %408 = vst [vmem:[#allocation8] sm:$0xff] %v407
        $region48: #{tpu_custom_call.1} parent=31 // pred_fallthru
          _
        // Predicated region
        $region49: #{tpu_custom_call.1} parent=31 // pred_check
          %p409 = pneg %p126
        $region50: #{tpu_custom_call.1} parent=31 // pred_check_branch
          %411 = sbr.rel (%p409) target = $region52
        $region51: #{tpu_custom_call.1} parent=31 // pred_region
          %413 = vsyncadd [#allocation5], 0
          %s414 = smul.addr %s25, 8
          %s415 = scalar_lea.hbm %s3, %s414
          %s417 = sshll.u32 [#allocation8], 4
          %s418 = int_to_ptr.vmem [resolvable:$true] %s417
          %s419 = sshll.u32 %s415, 4
          %s420 = int_to_ptr.hbm [resolvable:$true] %s419
          %422 = dma.vmem_to_hbm [thread:$0]  %s418, 128, %s420, [#allocation5]
        $region52: #{tpu_custom_call.1} parent=31 // pred_fallthru
          _
        // Predicated region
        $region53: #{tpu_custom_call.1} parent=31 // pred_check
          %p423 = pneg %p126
        $region54: #{tpu_custom_call.1} parent=31 // pred_check_branch
          %425 = sbr.rel (%p423) target = $region56
        $region55: #{tpu_custom_call.1} parent=31 // pred_region
          %427 = dma.done [#allocation5], 128
        $region56: #{tpu_custom_call.1} parent=31 // pred_fallthru
          _
      $region32: #{tpu_custom_call.1} parent=5 // pred_fallthru
        _
      %p428 = scmp.le.s32.totalorder 2, %s16
      // Predicated region
      $region57: #{tpu_custom_call.1} parent=5 // pred_check
        %p429 = pneg %p428
      $region58: #{tpu_custom_call.1} parent=5 // pred_check_branch
        %431 = sbr.rel (%p429) target = $region60
      $region59: #{tpu_custom_call.1} parent=5 // pred_region
        %s432 = ssub.s32 %s16, 2
      $region60: #{tpu_custom_call.1} parent=5 // pred_fallthru
        _
    $region6: #{tpu_custom_call.1} parent=1 // loop_footer
      %s20 = sadd.s32 1, %s16
    $region7: #{tpu_custom_call.1} parent=1 // loop_footer_branch
      %15 = sbr.rel target = $region3
    $region8: #{tpu_custom_call.1} parent=1 // loop_exit
      _
    %433 = vsyncpa [#allocation4], 1
    %s434 = scalar_lea.sflag [#allocation4], 1
    %435 = vsyncpa %s434, 1
    %436 = vsyncpa [#allocation7], 1
    %s437 = scalar_lea.sflag [#allocation7], 1
    %438 = vsyncpa %s437, 1
    %439 = vsyncpa [#allocation5], 1
    %s440 = scalar_lea.sflag [#allocation5], 1
    %441 = vsyncpa %s440, 1

</llo_original>
